<compile_context>
chip_gen: v6e
topology: v6e:2x2x1
jax: 0.10.0
libtpu: 0.0.40
codegen_flags: <defaults>
</compile_context>

<pallas_src>
import functools

import jax
import jax.numpy as jnp
from jax.experimental import pallas as pl
from jax.experimental.pallas import tpu as pltpu


_LANE = 128
_SUBLANE = 8
# Scoped-VMEM request: above v5e's 16 MiB default, well below v7x's 64 MiB.
_VMEM_LIMIT_BYTES = 32 * 1024 * 1024
# Byte budget for the pipelined blocks themselves (leaves headroom everywhere).
_BLOCK_BYTE_BUDGET = 24 * 1024 * 1024


def _round_up(x, m):
    return ((x + m - 1) // m) * m


def _pick_tile_rows(n, c, logits_itemsize, extra_row_bytes):
    """Batch-tile rows sized from a VMEM-bytes budget (lane padding included)."""
    lanes = _round_up(c, _LANE)                     # C is lane-padded in VMEM
    row_bytes = 2 * (lanes * logits_itemsize        # logits block (2 buffers)
                     + _LANE * 4                    # (rows, 1) int32 targets
                     + extra_row_bytes)             # per-row output, if any
    tile = _BLOCK_BYTE_BUDGET // row_bytes
    tile = max(_SUBLANE, (tile // _SUBLANE) * _SUBLANE)
    tile = min(tile, _round_up(n, _SUBLANE))
    return int(tile)


def _focal_tile(logits_ref, targets_ref, *, gamma):
    """Per-row (1 - pt)^gamma * ce for one (rows, C) tile -> (rows, 1) f32."""
    logits = logits_ref[...].astype(jnp.float32)        # (rows, C)
    tgt = targets_ref[...]                              # (rows, 1) int32
    rows, c = logits.shape

    cls = jax.lax.broadcasted_iota(jnp.int32, (rows, c), 1)
    is_tgt = cls == tgt                                  # (rows, C) predicate

    # Numerically stable softmax pieces over the class (lane) axis.
    m = jnp.max(logits, axis=-1, keepdims=True)          # (rows, 1)
    e = jnp.exp(logits - m)                              # (rows, C) one EUP pass
    sumexp = jnp.sum(e, axis=-1, keepdims=True)          # (rows, 1)

    # Target logit via masked sum (no float one-hot temporary).
    tgt_logit = jnp.sum(jnp.where(is_tgt, logits, 0.0), axis=-1, keepdims=True)
    ce = (m - tgt_logit) + jnp.log(sumexp)               # per-sample CE

    # (1 - pt) from the non-target exponentials already computed: exact for
    # small ce (no 1 - exp(-ce) cancellation) and drops a second EUP exp.
    non_tgt = jnp.sum(jnp.where(is_tgt, 0.0, e), axis=-1, keepdims=True)
    one_m_pt = non_tgt / sumexp

    g = float(gamma)
    if g == 0.0:
        w = jnp.ones_like(one_m_pt)
    elif g == 1.0:
        w = one_m_pt
    elif g == 2.0:
        w = one_m_pt * one_m_pt      # VPU multiply; keeps pow off the EUP slot
    else:
        w = one_m_pt ** g

    return w * ce                                        # (rows, 1)


def _focal_reduce_kernel(logits_ref, targets_ref, partial_ref, *,
                         gamma, n_valid, tile_rows, mask_rows):
    focal = _focal_tile(logits_ref, targets_ref, gamma=gamma)
    if mask_rows:
        # Only needed when the last block is ragged; select (not multiply) so
        # garbage rows (possible inf/NaN) are fully neutralized.
        row = (pl.program_id(0) * tile_rows
               + jax.lax.broadcasted_iota(jnp.int32, focal.shape, 0))
        focal = jnp.where(row < n_valid, focal, 0.0)
    partial_ref[...] = jnp.full(partial_ref.shape, jnp.sum(focal), jnp.float32)


def _focal_none_kernel(logits_ref, targets_ref, out_ref, *, alpha, gamma):
    # Garbage rows of a ragged final block are never written back / are sliced
    # off in the wrapper, so no mask is needed here.
    out_ref[...] = (alpha * _focal_tile(logits_ref, targets_ref, gamma=gamma)
                    ).astype(out_ref.dtype)


def focal_loss(logits, targets, *, alpha=1.0, gamma=2.0, reduction="mean"):
    """Pallas TPU implementation of FocalLoss.forward.

    logits : (N, C) float array (f32 or bf16; cast to f32 inside the kernel)
    targets: (N,)   integer class indices in [0, C)
    """
    N, C = logits.shape
    targets2d = targets.astype(jnp.int32).reshape(N, 1)   # cheap view, no big copy

    if reduction in ("mean", "sum"):
        tile = _pick_tile_rows(N, C, logits.dtype.itemsize, extra_row_bytes=0)
        num_tiles = pl.cdiv(N, tile)
        kernel = functools.partial(
            _focal_reduce_kernel, gamma=float(gamma), n_valid=N,
            tile_rows=tile, mask_rows=(N % tile != 0))
        partials = pl.pallas_call(
            kernel,
            out_shape=jax.ShapeDtypeStruct((num_tiles, _SUBLANE, _LANE),
                                           jnp.float32),
            grid=(num_tiles,),
            in_specs=[pl.BlockSpec((tile, C), lambda i: (i, 0)),
                      pl.BlockSpec((tile, 1), lambda i: (i, 0))],
            out_specs=pl.BlockSpec((1, _SUBLANE, _LANE), lambda i: (i, 0, 0)),
            compiler_params=pltpu.CompilerParams(
                dimension_semantics=("parallel",),
                vmem_limit_bytes=_VMEM_LIMIT_BYTES),
        )(logits, targets2d)
        # Finish the tiny reduction in the wrapper; alpha hoisted to one scalar
        # multiply instead of a per-element one.
        total = jnp.float32(alpha) * jnp.sum(partials[:, 0, 0])
        if reduction == "mean":
            total = total / jnp.float32(N)
        return total

    # reduction == 'none': per-sample focal loss.
    tile = _pick_tile_rows(N, C, logits.dtype.itemsize,
                           extra_row_bytes=_LANE * 4)
    num_tiles = pl.cdiv(N, tile)
    kernel = functools.partial(
        _focal_none_kernel, alpha=float(alpha), gamma=float(gamma))
    out = pl.pallas_call(
        kernel,
        out_shape=jax.ShapeDtypeStruct((N, 1), jnp.float32),
        grid=(num_tiles,),
        in_specs=[pl.BlockSpec((tile, C), lambda i: (i, 0)),
                  pl.BlockSpec((tile, 1), lambda i: (i, 0))],
        out_specs=pl.BlockSpec((tile, 1), lambda i: (i, 0)),
        compiler_params=pltpu.CompilerParams(
            dimension_semantics=("parallel",),
            vmem_limit_bytes=_VMEM_LIMIT_BYTES),
    )(logits, targets2d)
    return out[:, 0]


def _focal_loss_ref(logits, targets, *, alpha=1.0, gamma=2.0, reduction="mean"):
    """Pure-JAX reference for correctness checking."""
    logits = logits.astype(jnp.float32)
    lse = jax.nn.logsumexp(logits, axis=-1)
    tgt_logit = jnp.take_along_axis(
        logits, targets[:, None].astype(jnp.int32), axis=-1)[:, 0]
    ce = lse - tgt_logit
    pt = jnp.exp(-ce)
    fl = alpha * (1.0 - pt) ** gamma * ce
    if reduction == "mean":
        return jnp.mean(fl)
    if reduction == "sum":
        return jnp.sum(fl)
    return fl


if __name__ == "__main__":
    # Shapes consistent with the module's surrounding script: N=16 samples,
    # C=20 classes, standard (N, C) logits + (N,) integer targets.
    N, C = 16, 20
    key = jax.random.PRNGKey(0)
    k_logits, k_targets = jax.random.split(key)

    logits = jax.random.normal(k_logits, (N, C), dtype=jnp.float32)
    targets = jax.random.randint(k_targets, (N,), 0, C, dtype=jnp.int32)

    loss_mean = jax.block_until_ready(
        focal_loss(logits, targets, alpha=1.0, gamma=2.0, reduction="mean"))
    ref_mean = _focal_loss_ref(logits, targets, alpha=1.0, gamma=2.0,
                               reduction="mean")
    assert jnp.allclose(loss_mean, ref_mean, rtol=1e-5, atol=1e-5), (
        loss_mean, ref_mean)

    loss_sum = jax.block_until_ready(
        focal_loss(logits, targets, alpha=1.0, gamma=2.0, reduction="sum"))
    ref_sum = _focal_loss_ref(logits, targets, alpha=1.0, gamma=2.0,
                              reduction="sum")
    assert jnp.allclose(loss_sum, ref_sum, rtol=1e-5, atol=1e-5), (
        loss_sum, ref_sum)

    per_sample = jax.block_until_ready(
        focal_loss(logits, targets, alpha=1.0, gamma=2.0, reduction="none"))
    ref_none = _focal_loss_ref(logits, targets, alpha=1.0, gamma=2.0,
                               reduction="none")
    assert jnp.allclose(per_sample, ref_none, rtol=1e-5, atol=1e-5), (
        per_sample, ref_none)

    print("KERNEL_OK")
</pallas_src>

<mosaic_0001>
module attributes {stable_mosaic.version = 11 : i64} {
  func.func @_focal_reduce_kernel(%arg0: i32, %arg1: memref<16x20xf32, #tpu.memory_space<vmem>>, %arg2: memref<16x1xi32, #tpu.memory_space<vmem>>, %arg3: memref<1x8x128xf32, #tpu.memory_space<vmem>>) attributes {dimension_semantics = [#tpu.dimension_semantics<parallel>], iteration_bounds = array<i64: 1>, scalar_prefetch = 0 : i64, scratch_operands = 0 : i64, tpu.core_type = #tpu.core_type<tc>, window_params = [{transform_indices = @transform_0, window_bounds = array<i64: 16, 20>}, {transform_indices = @transform_1, window_bounds = array<i64: 16, 1>}, {transform_indices = @transform_2, window_bounds = array<i64: 1, 8, 128>}]} {
    %c0 = arith.constant 0 : index
    %c0_0 = arith.constant 0 : index
    %0 = vector.load %arg1[%c0, %c0_0] : memref<16x20xf32, #tpu.memory_space<vmem>>, vector<16x20xf32>
    %c0_1 = arith.constant 0 : index
    %c0_2 = arith.constant 0 : index
    %1 = vector.load %arg2[%c0_1, %c0_2] : memref<16x1xi32, #tpu.memory_space<vmem>>, vector<16x1xi32>
    %2 = tpu.iota {dimensions = array<i32: 1>} : vector<16x20xi32>
    %3 = vector.broadcast %1 : vector<16x1xi32> to vector<16x20xi32>
    %4 = arith.cmpi eq, %2, %3 : vector<16x20xi32>
    %cst = arith.constant dense<0xFF800000> : vector<16xf32>
    %5 = vector.multi_reduction <maximumf>, %0, %cst [1] : vector<16x20xf32> to vector<16xf32>
    %6 = vector.shape_cast %5 : vector<16xf32> to vector<16x1xf32>
    %7 = vector.broadcast %6 : vector<16x1xf32> to vector<16x20xf32>
    %8 = arith.subf %0, %7 : vector<16x20xf32>
    %9 = math.exp %8 : vector<16x20xf32>
    %cst_3 = arith.constant dense<0.000000e+00> : vector<16xf32>
    %10 = vector.multi_reduction <add>, %9, %cst_3 [1] : vector<16x20xf32> to vector<16xf32>
    %11 = vector.shape_cast %10 : vector<16xf32> to vector<16x1xf32>
    %cst_4 = arith.constant 0.000000e+00 : f32
    %12 = vector.broadcast %cst_4 : f32 to vector<16x20xf32>
    %13 = arith.select %4, %0, %12 : vector<16x20xi1>, vector<16x20xf32>
    %cst_5 = arith.constant dense<0.000000e+00> : vector<16xf32>
    %14 = vector.multi_reduction <add>, %13, %cst_5 [1] : vector<16x20xf32> to vector<16xf32>
    %15 = vector.shape_cast %14 : vector<16xf32> to vector<16x1xf32>
    %16 = arith.subf %6, %15 : vector<16x1xf32>
    %17 = math.log %11 : vector<16x1xf32>
    %18 = arith.addf %16, %17 : vector<16x1xf32>
    %cst_6 = arith.constant 0.000000e+00 : f32
    %19 = vector.broadcast %cst_6 : f32 to vector<16x20xf32>
    %20 = arith.select %4, %19, %9 : vector<16x20xi1>, vector<16x20xf32>
    %cst_7 = arith.constant dense<0.000000e+00> : vector<16xf32>
    %21 = vector.multi_reduction <add>, %20, %cst_7 [1] : vector<16x20xf32> to vector<16xf32>
    %22 = vector.shape_cast %21 : vector<16xf32> to vector<16x1xf32>
    %23 = arith.divf %22, %11 : vector<16x1xf32>
    %24 = arith.mulf %23, %23 : vector<16x1xf32>
    %25 = arith.mulf %24, %18 : vector<16x1xf32>
    %26 = vector.shape_cast %25 : vector<16x1xf32> to vector<1x16x1xf32>
    %cst_8 = arith.constant dense<0.000000e+00> : vector<1xf32>
    %27 = vector.multi_reduction <add>, %26, %cst_8 [1, 2] : vector<1x16x1xf32> to vector<1xf32>
    %28 = vector.shape_cast %27 : vector<1xf32> to vector<1x1x1xf32>
    %29 = vector.extract %28[0, 0, 0] : f32 from vector<1x1x1xf32>
    %30 = vector.broadcast %29 : f32 to vector<1x8x128xf32>
    %c0_9 = arith.constant 0 : index
    %c0_10 = arith.constant 0 : index
    %c0_11 = arith.constant 0 : index
    %31 = vector.load %arg3[%c0_9, %c0_10, %c0_11] : memref<1x8x128xf32, #tpu.memory_space<vmem>>, vector<1x8x128xf32>
    tpu.vector_store %arg3[%c0_9, %c0_10, %c0_11], %30 {strides = array<i32>} : memref<1x8x128xf32, #tpu.memory_space<vmem>>, vector<1x8x128xf32>,
    return
  }
  func.func @transform_0(%arg0: i32) -> (i32, i32) {
    %c0_i32 = arith.constant 0 : i32
    %c0_i32_0 = arith.constant 0 : i32
    return %arg0, %c0_i32 : i32, i32
  }
  func.func @transform_1(%arg0: i32) -> (i32, i32) {
    %c0_i32 = arith.constant 0 : i32
    %c0_i32_0 = arith.constant 0 : i32
    return %arg0, %c0_i32 : i32, i32
  }
  func.func @transform_2(%arg0: i32) -> (i32, i32, i32) {
    %c0_i32 = arith.constant 0 : i32
    %c0_i32_0 = arith.constant 0 : i32
    %c0_i32_1 = arith.constant 0 : i32
    return %arg0, %c0_i32, %c0_i32_0 : i32, i32, i32
  }
}

</mosaic_0001>

<llo_original>
// kernel: tpu_custom_call.1
$region0: #{tpu_custom_call.1}
  #allocation0 [shape = 'u32[]', space=smem, size = 0x4, offset = 0x4, fixed_abs, tag = 'smem constant byte address 0x4 - core index']
  #allocation1 [shape = 'u32[144,128]{1,0:T(1,128)}', space=vmem, size = 0x12000, scoped, tag = 'internal scratch']
  %s0 = inlined_call_operand.vmem [shape: f32[16,20], index: 0, kind: input, shape index: {}]
  %s1 = inlined_call_operand.vmem [shape: s32[16,1], index: 1, kind: input, shape index: {}]
  %s2 = inlined_call_operand.hbm [shape: f32[1,8,128], index: 2, kind: output, shape index: {}]
  %s3 = sld [smem:[#allocation0]]
  $region18: #{tpu_custom_call.1} parent=0
    _
  %s5 = ssub.s32 1, %s3
  %s6 = scalar_select 0, %s5, %s3
  $region1: #{tpu_custom_call.1} parent=0
    #allocation2 [shape = 'u8[4096]{0}', space=vmem, size = 0x1000, scoped, tag = 'output window, operand 0, single buffered']
    #allocation3 [shape = 's32[1]{0}', space=sflag, size = 0x4, scoped, tag = 'scoped memory for tpu_custom_call.1']
    %7 = vsyncpa [#allocation3], 0
    // Predicated region
    $region2: #{tpu_custom_call.1} parent=1 // pred_check
      _
    $region3: #{tpu_custom_call.1} parent=1 // pred_check_branch
      %9 = sbr.rel (0) target = $region5
    $region4: #{tpu_custom_call.1} parent=1 // pred_region
      _
    $region5: #{tpu_custom_call.1} parent=1 // pred_fallthru
      _
    // Predicated region
    $region6: #{tpu_custom_call.1} parent=1 // pred_check
      _
    $region7: #{tpu_custom_call.1} parent=1 // pred_check_branch
      %11 = sbr.rel (0) target = $region9
    $region8: #{tpu_custom_call.1} parent=1 // pred_region
      _
    $region9: #{tpu_custom_call.1} parent=1 // pred_fallthru
      _
    %v12 = vld [vmem:[%s0] sm:$0xff]
    %v13 = vld [vmem:[%s0 + $0x8] sm:$0xff]
    %v14 = vld [vmem:[%s1] sm:$0xff]
    %v15 = vld [vmem:[%s1 + $0x8] sm:$0xff]
    %v16 = vlaneseq
    %v17 = vand.u32 %v16, 127
    %18 = vset.pattern.permute.xlu0 0
    %19 = vperm.xlu0 %18, %v14
    %v20 = vpop.permute.xlu0 %19
    %21 = vset.pattern.permute.xlu0 0
    %22 = vperm.xlu0 %21, %v15
    %v23 = vpop.permute.xlu0 %22
    %vm24 = vcmp.eq.s32.totalorder %v17, %v20
    %vm25 = vcmp.eq.s32.totalorder %v17, %v23
    %vm26 = vcmask 162816
    %v27 = vsel %vm26, %v12, -inf
    %28 = vmax.xlane.f32.xlu0 %v27
    %v29 = vpop.xlane.xlu0 %28
    %v30 = vsel %vm26, %v13, -inf
    %31 = vmax.xlane.f32.xlu0 %v30
    %v32 = vpop.xlane.xlu0 %31
    %v33 = vsub.f32 %v12, %v29
    %v34 = vsub.f32 %v13, %v32
    %v35 = vmul.f32 %v33, 1.442695
    %v36 = vpow.pop %v35
    %v37 = vmul.f32 %v34, 1.442695
    %v38 = vpow.pop %v37
    %v39 = vsel %vm26, %v36, 0.0
    %40 = vadd.xlane.f32.xlu0 %v39
    %v41 = vpop.xlane.xlu0 %40
    %v42 = vsel %vm26, %v38, 0.0
    %43 = vadd.xlane.f32.xlu0 %v42
    %v44 = vpop.xlane.xlu0 %43
    %v45 = vsel %vm24, %v12, 0.0
    %v46 = vsel %vm25, %v13, 0.0
    %v47 = vsel %vm26, %v45, 0.0
    %48 = vadd.xlane.f32.xlu0 %v47
    %v49 = vpop.xlane.xlu0 %48
    %v50 = vsel %vm26, %v46, 0.0
    %51 = vadd.xlane.f32.xlu0 %v50
    %v52 = vpop.xlane.xlu0 %51
    %v53 = vsub.f32 %v29, %v49
    %v54 = vsub.f32 %v32, %v52
    %v55 = vlog2.pop %v41
    %v56 = vmul.f32 %v55, 0.6931472
    %v57 = vlog2.pop %v44
    %v58 = vmul.f32 %v57, 0.6931472
    %v59 = vadd.f32 %v53, %v56
    %v60 = vadd.f32 %v54, %v58
    %v61 = vsel %vm24, 0.0, %v36
    %v62 = vsel %vm25, 0.0, %v38
    %v63 = vsel %vm26, %v61, 0.0
    %64 = vadd.xlane.f32.xlu0 %v63
    %v65 = vpop.xlane.xlu0 %64
    %v66 = vsel %vm26, %v62, 0.0
    %67 = vadd.xlane.f32.xlu0 %v66
    %v68 = vpop.xlane.xlu0 %67
    %v69 = vrcp.pop %v41
    %v70 = vmul.f32 %v65, %v69
    %v71 = vrcp.pop %v44
    %v72 = vmul.f32 %v68, %v71
    %v73 = vmul.f32 %v70, %v70
    %v74 = vmul.f32 %v72, %v72
    %v75 = vmul.f32 %v73, %v59
    %v76 = vmul.f32 %v74, %v60
    %vm77 = vcmask 7168
    %v78 = vsel %vm77, %v75, 0.0
    %v79 = vsel %vm77, %v76, 0.0
    %v80 = vadd.f32 %v78, %v79
    %81 = vadd.xlane.f32.xlu0 %v80
    %v82 = vpop.xlane.xlu0 %81
    %v83 = vrot.slane %v82, 4
    %v84 = vadd.f32 %v82, %v83
    %v85 = vrot.slane %v84, 2
    %v86 = vadd.f32 %v84, %v85
    %v87 = vrot.slane %v86, 1
    %v88 = vadd.f32 %v86, %v87
    %s89 = vtos %v88
    %v90 = vstv %s89
    %91 = vst [vmem:[#allocation2] sm:$0xff] %v90
    // Predicated region
    $region10: #{tpu_custom_call.1} parent=1 // pred_check
      _
    $region11: #{tpu_custom_call.1} parent=1 // pred_check_branch
      %93 = sbr.rel (0) target = $region13
    $region12: #{tpu_custom_call.1} parent=1 // pred_region
      %s95 = ssub.s32 128, 128
      %96 = vsyncadd [#allocation3], %s95
      %s98 = sshll.u32 [#allocation2], 4
      %s99 = int_to_ptr.vmem [resolvable:$true] %s98
      %101 = dma.vmem_to_hbm [thread:$0]  %s99, 128, %s2, [#allocation3]
    $region13: #{tpu_custom_call.1} parent=1 // pred_fallthru
      _
    // Predicated region
    $region14: #{tpu_custom_call.1} parent=1 // pred_check
      _
    $region15: #{tpu_custom_call.1} parent=1 // pred_check_branch
      %103 = sbr.rel (0) target = $region17
    $region16: #{tpu_custom_call.1} parent=1 // pred_region
      %104 = dma.done [#allocation3], 128
    $region17: #{tpu_custom_call.1} parent=1 // pred_fallthru
      _
    %105 = vsyncpa [#allocation3], 1

</llo_original>
